<compile_context>
chip_gen: v5e
topology: v5e:2x2
jax: 0.10.0
libtpu: 0.0.40
codegen_flags: <defaults>
</compile_context>

<pallas_src>
import jax
import jax.numpy as jnp
from jax.experimental import pallas as pl
from jax.experimental.pallas import tpu as pltpu

# ----------------------------- small BERT config -----------------------------
B, S, H = 2, 8, 32          # batch, seq len, hidden size
NH, HD = 4, 8               # num heads, head dim (NH * HD == H)
FF = 64                     # intermediate (FFN) size
VOCAB = 100
NTYPES = 2
MAXPOS = 64
NLAYERS = 2
LN_EPS = 1e-12
NT = B * S                  # flattened token count


# ----------------------------- in-kernel helpers ------------------------------
def _layernorm(x, g, b):
    # two-pass variance (E[(x-mu)^2]) to match PyTorch LayerNorm numerics
    mu = jnp.mean(x, axis=-1, keepdims=True)
    xc = x - mu
    var = jnp.mean(xc * xc, axis=-1, keepdims=True)
    return xc * jax.lax.rsqrt(var + LN_EPS) * g + b


def _gelu(x):
    # TODO(synk): HF BERT uses exact (erf) GELU; tanh approximation used here
    # for robust Mosaic lowering (numerically very close).
    return 0.5 * x * (1.0 + jnp.tanh(0.7978845608028654 * (x + 0.044715 * x * x * x)))


# ----------------------------- fused Pallas kernel ----------------------------
def bert_kernel(lens_ref,                                   # SMEM scalar prefetch (B,)
                emb_ref, embln_ref, wqkv_ref, wo_ref, wi_ref, wo2_ref, vecs_ref,
                out_ref):
    b = pl.program_id(0)       # sequence index  ("parallel": split over TCs on v7x)
    l = pl.program_id(1)       # layer index     ("arbitrary": weights pipelined)

    # ---- embedding LayerNorm once per sequence; out_ref doubles as the resident
    # activation buffer across the layer axis (same out block for every l). ----
    @pl.when(l == 0)
    def _():
        out_ref[...] = _layernorm(emb_ref[...], embln_ref[0:1, :], embln_ref[1:2, :])

    x = out_ref[...]                                        # (S, H) f32, VMEM resident

    # ---- additive attention mask for this sequence (right-padded) ----
    # TODO(synk): assumes the standard right-padded prefix mask; arbitrary masks
    # would need the mask passed into the kernel directly.
    col = jax.lax.broadcasted_iota(jnp.int32, (S, S), 1)
    mask_add = jnp.where(col < lens_ref[b], 0.0, -10000.0).astype(jnp.float32)

    vec = vecs_ref[0]                                       # (8, 3H) packed vectors (f32)
    b_qkv = vec[0:1, :]
    b_o, ln1g, ln1b = vec[1:2, :H], vec[2:3, :H], vec[3:4, :H]
    b_i = vec[4:5, :FF]
    b_o2, ln2g, ln2b = vec[5:6, :H], vec[6:7, :H], vec[7:8, :H]

    # ---- fused QKV projection: bf16 operands, f32 accumulation ----
    qkv = jnp.dot(x.astype(jnp.bfloat16), wqkv_ref[0],
                  preferred_element_type=jnp.float32) + b_qkv          # (S, 3H) f32

    scale = 1.0 / (HD ** 0.5)
    ctx_heads = []
    for h in range(NH):
        # Heads are in-register lane slices of qkv: no VMEM staging, no masked
        # stores, no reloads; lane axis stays dense.
        qh = qkv[:, h * HD:(h + 1) * HD].astype(jnp.bfloat16)
        kh = qkv[:, H + h * HD:H + (h + 1) * HD].astype(jnp.bfloat16)
        vh = qkv[:, 2 * H + h * HD:2 * H + (h + 1) * HD].astype(jnp.bfloat16)
        # scores = qh @ kh^T (contraction on dim 1 of both operands)
        sc = jax.lax.dot_general(qh, kh, (((1,), (1,)), ((), ())),
                                 preferred_element_type=jnp.float32) * scale + mask_add
        m = jnp.max(sc, axis=-1, keepdims=True)
        e = jnp.exp(sc - m)
        p = e / jnp.sum(e, axis=-1, keepdims=True)          # exact softmax (f32)
        ctx_heads.append(jnp.dot(p.astype(jnp.bfloat16), vh,
                                 preferred_element_type=jnp.float32))  # (S, HD)
    ctx = jnp.concatenate(ctx_heads, axis=-1)               # (S, H), head-major lanes

    # ---- fused output projection: single (S,H)@(H,H) dot with K=H ----
    attn = jnp.dot(ctx.astype(jnp.bfloat16), wo_ref[0],
                   preferred_element_type=jnp.float32)
    h1 = _layernorm(x + attn + b_o, ln1g, ln1b)

    # ---- feed-forward ----
    ff = _gelu(jnp.dot(h1.astype(jnp.bfloat16), wi_ref[0],
                       preferred_element_type=jnp.float32) + b_i)
    ff = jnp.dot(ff.astype(jnp.bfloat16), wo2_ref[0],
                 preferred_element_type=jnp.float32) + b_o2
    out_ref[...] = _layernorm(h1 + ff, ln2g, ln2b)


# ----------------------------- wrapper -----------------------------------------
def _cost_estimate():
    per_seq_layer_flops = (2 * S * H * 3 * H          # QKV
                           + 2 * S * S * H            # scores (all heads)
                           + 2 * S * S * H            # context (all heads)
                           + 2 * S * H * H            # output projection
                           + 2 * S * H * FF           # FFN in
                           + 2 * S * FF * H)          # FFN out
    flops = B * NLAYERS * per_seq_layer_flops
    transcendentals = B * NLAYERS * (NH * S * S + S * FF + 4 * S)
    weight_bytes = 2 * (H * 3 * H + H * H + H * FF + FF * H) + 4 * 8 * 3 * H
    bytes_accessed = B * NLAYERS * weight_bytes + 2 * 4 * NT * H + 4 * B + 4 * 2 * H
    return pl.CostEstimate(flops=flops, transcendentals=transcendentals,
                           bytes_accessed=bytes_accessed)


def bert_pallas(lens, emb2, params):
    grid_spec = pltpu.PrefetchScalarGridSpec(
        num_scalar_prefetch=1,                          # lens -> SMEM
        grid=(B, NLAYERS),                              # batch (parallel) x layer (arbitrary)
        in_specs=[
            pl.BlockSpec((S, H), lambda b, l, lens: (b, 0)),             # embeddings
            pl.BlockSpec((2, H), lambda b, l, lens: (0, 0)),             # emb LN params
            pl.BlockSpec((1, H, 3 * H), lambda b, l, lens: (l, 0, 0)),   # Wqkv (bf16)
            pl.BlockSpec((1, H, H), lambda b, l, lens: (l, 0, 0)),       # Wo   (bf16)
            pl.BlockSpec((1, H, FF), lambda b, l, lens: (l, 0, 0)),      # Wi   (bf16)
            pl.BlockSpec((1, FF, H), lambda b, l, lens: (l, 0, 0)),      # Wo2  (bf16)
            pl.BlockSpec((1, 8, 3 * H), lambda b, l, lens: (l, 0, 0)),   # packed vectors
        ],
        out_specs=pl.BlockSpec((S, H), lambda b, l, lens: (b, 0)),
    )
    return pl.pallas_call(
        bert_kernel,
        out_shape=jax.ShapeDtypeStruct((NT, H), jnp.float32),
        grid_spec=grid_spec,
        compiler_params=pltpu.CompilerParams(
            dimension_semantics=("parallel", "arbitrary"),
            vmem_limit_bytes=16 * 1024 * 1024),
        cost_estimate=_cost_estimate(),
    )(lens, emb2, params["emb_ln"], params["wqkv"], params["wo"],
      params["wi"], params["wo2"], params["vecs"])


# ----------------------------- parameter init -----------------------------------
def init_params(key):
    def nrm(k, shape, std=0.02):
        return (std * jax.random.normal(k, shape)).astype(jnp.float32)

    keys = jax.random.split(key, 4 + NLAYERS)
    params = {
        "word_emb": nrm(keys[0], (VOCAB, H)),
        "pos_emb": nrm(keys[1], (MAXPOS, H)),
        "tok_emb": nrm(keys[2], (NTYPES, H)),
        # embedding LN packed as (2, H): row 0 = gamma, row 1 = beta
        "emb_ln": jnp.concatenate([jnp.ones((1, H), jnp.float32),
                                   jnp.zeros((1, H), jnp.float32)], axis=0),
    }

    def pad96(v):
        return jnp.pad(v, (0, 3 * H - v.shape[0]))

    wqkv, wo, wi, wo2, vecs = [], [], [], [], []
    for li in range(NLAYERS):
        lk = jax.random.split(keys[4 + li], 6)
        wq, wk, wv = nrm(lk[0], (H, H)), nrm(lk[1], (H, H)), nrm(lk[2], (H, H))
        wqkv.append(jnp.concatenate([wq, wk, wv], axis=1))        # (H, 3H)
        wo.append(nrm(lk[3], (H, H)))                             # (H, H), rows head-major
        wi.append(nrm(lk[4], (H, FF)))
        wo2.append(nrm(lk[5], (FF, H)))
        rows = [jnp.zeros((3 * H,), jnp.float32),                 # b_qkv
                jnp.zeros((H,), jnp.float32),                     # b_o
                jnp.ones((H,), jnp.float32),                      # ln1 gamma
                jnp.zeros((H,), jnp.float32),                     # ln1 beta
                jnp.zeros((FF,), jnp.float32),                    # b_i
                jnp.zeros((H,), jnp.float32),                     # b_o2
                jnp.ones((H,), jnp.float32),                      # ln2 gamma
                jnp.zeros((H,), jnp.float32)]                     # ln2 beta
        vecs.append(jnp.stack([pad96(r) for r in rows]))          # (8, 3H)

    # matmul weights in bf16 (MXU-native on v6e/v7x, half the DMA/VMEM);
    # small vectors / LN params stay f32 (elementwise path, esp. v5e).
    params["wqkv"] = jnp.stack(wqkv).astype(jnp.bfloat16)   # (L, H, 3H)
    params["wo"] = jnp.stack(wo).astype(jnp.bfloat16)       # (L, H, H)
    params["wi"] = jnp.stack(wi).astype(jnp.bfloat16)       # (L, H, FF)
    params["wo2"] = jnp.stack(wo2).astype(jnp.bfloat16)     # (L, FF, H)
    params["vecs"] = jnp.stack(vecs)                        # (L, 8, 3H) f32
    return params


# ----------------------------- full forward (== Bert.forward) --------------------
@jax.jit
def bert_forward(params, x_ids, segs, mask):
    # Embedding gathers stay in plain JAX as glue; everything else is one fused
    # Pallas kernel.
    pos_ids = jnp.arange(S, dtype=jnp.int32)
    emb = (jnp.take(params["word_emb"], x_ids, axis=0)
           + jnp.take(params["pos_emb"], pos_ids, axis=0)[None, :, :]
           + jnp.take(params["tok_emb"], segs, axis=0))           # (B, S, H)
    emb2 = emb.reshape(NT, H)

    # Per-sequence lengths for the in-kernel additive mask (right-padded mask).
    lens = jnp.sum(mask, axis=-1).astype(jnp.int32)               # (B,)

    top_vec = bert_pallas(lens, emb2, params).reshape(B, S, H)    # last encoder layer
    return top_vec


# ----------------------------- main -----------------------------------------------
if __name__ == "__main__":
    key = jax.random.PRNGKey(0)
    pkey, xkey, skey = jax.random.split(key, 3)

    params = init_params(pkey)

    x_ids = jax.random.randint(xkey, (B, S), 0, VOCAB, dtype=jnp.int32)
    segs = jax.random.randint(skey, (B, S), 0, NTYPES, dtype=jnp.int32)
    # attention mask: 1 = real token, 0 = padding (second sequence has 2 pads)
    lengths = jnp.array([S, S - 2], dtype=jnp.int32)
    mask = (jnp.arange(S)[None, :] < lengths[:, None]).astype(jnp.float32)

    top_vec = bert_forward(params, x_ids, segs, mask)
    top_vec = jax.block_until_ready(top_vec)

    assert top_vec.shape == (B, S, H) and top_vec.dtype == jnp.float32
    assert bool(jnp.all(jnp.isfinite(top_vec)))
    print("KERNEL_OK")
</pallas_src>

<mosaic_0001>
module attributes {stable_mosaic.version = 11 : i64} {
  func.func @bert_kernel(%arg0: i32, %arg1: i32, %arg2: memref<2xi32, #tpu.memory_space<smem>>, %arg3: memref<8x32xf32, #tpu.memory_space<vmem>>, %arg4: memref<2x32xf32, #tpu.memory_space<vmem>>, %arg5: memref<1x32x96xbf16, #tpu.memory_space<vmem>>, %arg6: memref<1x32x32xbf16, #tpu.memory_space<vmem>>, %arg7: memref<1x32x64xbf16, #tpu.memory_space<vmem>>, %arg8: memref<1x64x32xbf16, #tpu.memory_space<vmem>>, %arg9: memref<1x8x96xf32, #tpu.memory_space<vmem>>, %arg10: memref<8x32xf32, #tpu.memory_space<vmem>>) attributes {dimension_semantics = [#tpu.dimension_semantics<parallel>, #tpu.dimension_semantics<arbitrary>], iteration_bounds = array<i64: 2, 2>, scalar_prefetch = 1 : i64, scratch_operands = 0 : i64, tpu.core_type = #tpu.core_type<tc>, window_params = [{transform_indices = @transform_0, window_bounds = array<i64: 8, 32>}, {pipeline_mode = #tpu.pipeline_mode<synchronous>, transform_indices = @transform_1, window_bounds = array<i64: 2, 32>}, {transform_indices = @transform_2, window_bounds = array<i64: 1, 32, 96>}, {transform_indices = @transform_3, window_bounds = array<i64: 1, 32, 32>}, {transform_indices = @transform_4, window_bounds = array<i64: 1, 32, 64>}, {transform_indices = @transform_5, window_bounds = array<i64: 1, 64, 32>}, {transform_indices = @transform_6, window_bounds = array<i64: 1, 8, 96>}, {transform_indices = @transform_7, window_bounds = array<i64: 8, 32>}]} {
    %c0_i32 = arith.constant 0 : i32
    %0 = arith.cmpi eq, %arg1, %c0_i32 : i32
    %1 = arith.extui %0 : i1 to i32
    %c0_i32_0 = arith.constant 0 : i32
    %2 = arith.cmpi ne, %1, %c0_i32_0 : i32
    scf.if %2 {
      %c0_58 = arith.constant 0 : index
      %c0_59 = arith.constant 0 : index
      %187 = vector.load %arg3[%c0_58, %c0_59] : memref<8x32xf32, #tpu.memory_space<vmem>>, vector<8x32xf32>
      %c0_60 = arith.constant 0 : index
      %c0_61 = arith.constant 0 : index
      %188 = vector.load %arg4[%c0_60, %c0_61] : memref<2x32xf32, #tpu.memory_space<vmem>>, vector<1x32xf32>
      %c1 = arith.constant 1 : index
      %c0_62 = arith.constant 0 : index
      %189 = vector.load %arg4[%c1, %c0_62] : memref<2x32xf32, #tpu.memory_space<vmem>>, vector<1x32xf32>
      %cst_63 = arith.constant dense<0.000000e+00> : vector<8xf32>
      %190 = vector.multi_reduction <add>, %187, %cst_63 [1] : vector<8x32xf32> to vector<8xf32>
      %191 = vector.shape_cast %190 : vector<8xf32> to vector<8x1xf32>
      %cst_64 = arith.constant 3.200000e+01 : f32
      %192 = vector.broadcast %cst_64 : f32 to vector<8x1xf32>
      %193 = arith.divf %191, %192 : vector<8x1xf32>
      %194 = vector.broadcast %193 : vector<8x1xf32> to vector<8x32xf32>
      %195 = arith.subf %187, %194 : vector<8x32xf32>
      %196 = arith.mulf %195, %195 : vector<8x32xf32>
      %cst_65 = arith.constant dense<0.000000e+00> : vector<8xf32>
      %197 = vector.multi_reduction <add>, %196, %cst_65 [1] : vector<8x32xf32> to vector<8xf32>
      %198 = vector.shape_cast %197 : vector<8xf32> to vector<8x1xf32>
      %cst_66 = arith.constant 3.200000e+01 : f32
      %199 = vector.broadcast %cst_66 : f32 to vector<8x1xf32>
      %200 = arith.divf %198, %199 : vector<8x1xf32>
      %cst_67 = arith.constant 9.99999996E-13 : f32
      %201 = vector.broadcast %cst_67 : f32 to vector<8x1xf32>
      %202 = arith.addf %200, %201 : vector<8x1xf32>
      %203 = math.rsqrt %202 : vector<8x1xf32>
      %204 = vector.broadcast %203 : vector<8x1xf32> to vector<8x32xf32>
      %205 = arith.mulf %195, %204 : vector<8x32xf32>
      %206 = vector.broadcast %188 : vector<1x32xf32> to vector<8x32xf32>
      %207 = arith.mulf %205, %206 : vector<8x32xf32>
      %208 = vector.broadcast %189 : vector<1x32xf32> to vector<8x32xf32>
      %209 = arith.addf %207, %208 : vector<8x32xf32>
      %c0_68 = arith.constant 0 : index
      %c0_69 = arith.constant 0 : index
      %210 = vector.load %arg10[%c0_68, %c0_69] : memref<8x32xf32, #tpu.memory_space<vmem>>, vector<8x32xf32>
      tpu.vector_store %arg10[%c0_68, %c0_69], %209 {strides = array<i32>} : memref<8x32xf32, #tpu.memory_space<vmem>>, vector<8x32xf32>,
    } else {
    }
    %c0 = arith.constant 0 : index
    %c0_1 = arith.constant 0 : index
    %3 = vector.load %arg10[%c0, %c0_1] : memref<8x32xf32, #tpu.memory_space<vmem>>, vector<8x32xf32>
    %4 = tpu.iota {dimensions = array<i32: 1>} : vector<8x8xi32>
    %5 = arith.index_cast %arg0 : i32 to index
    %6 = memref.load %arg2[%5] : memref<2xi32, #tpu.memory_space<smem>>
    %7 = vector.broadcast %6 : i32 to vector<8x8xi32>
    %8 = arith.cmpi slt, %4, %7 : vector<8x8xi32>
    %cst = arith.constant 0.000000e+00 : f32
    %cst_2 = arith.constant -1.000000e+04 : f32
    %9 = vector.broadcast %cst : f32 to vector<8x8xf32>
    %10 = vector.broadcast %cst_2 : f32 to vector<8x8xf32>
    %11 = arith.select %8, %9, %10 : vector<8x8xi1>, vector<8x8xf32>
    %c0_3 = arith.constant 0 : index
    %c0_4 = arith.constant 0 : index
    %c0_5 = arith.constant 0 : index
    %12 = vector.load %arg9[%c0_3, %c0_4, %c0_5] : memref<1x8x96xf32, #tpu.memory_space<vmem>>, vector<1x8x96xf32>
    %13 = vector.shape_cast %12 : vector<1x8x96xf32> to vector<8x96xf32>
    %14 = vector.extract_strided_slice %13 {offsets = [0, 0], sizes = [1, 96], strides = [1, 1]} : vector<8x96xf32> to vector<1x96xf32>
    %15 = vector.extract_strided_slice %13 {offsets = [1, 0], sizes = [1, 32], strides = [1, 1]} : vector<8x96xf32> to vector<1x32xf32>
    %16 = vector.extract_strided_slice %13 {offsets = [2, 0], sizes = [1, 32], strides = [1, 1]} : vector<8x96xf32> to vector<1x32xf32>
    %17 = vector.extract_strided_slice %13 {offsets = [3, 0], sizes = [1, 32], strides = [1, 1]} : vector<8x96xf32> to vector<1x32xf32>
    %18 = vector.extract_strided_slice %13 {offsets = [4, 0], sizes = [1, 64], strides = [1, 1]} : vector<8x96xf32> to vector<1x64xf32>
    %19 = vector.extract_strided_slice %13 {offsets = [5, 0], sizes = [1, 32], strides = [1, 1]} : vector<8x96xf32> to vector<1x32xf32>
    %20 = vector.extract_strided_slice %13 {offsets = [6, 0], sizes = [1, 32], strides = [1, 1]} : vector<8x96xf32> to vector<1x32xf32>
    %21 = vector.extract_strided_slice %13 {offsets = [7, 0], sizes = [1, 32], strides = [1, 1]} : vector<8x96xf32> to vector<1x32xf32>
    %22 = arith.truncf %3 : vector<8x32xf32> to vector<8x32xbf16>
    %c0_6 = arith.constant 0 : index
    %c0_7 = arith.constant 0 : index
    %c0_8 = arith.constant 0 : index
    %23 = vector.load %arg5[%c0_6, %c0_7, %c0_8] : memref<1x32x96xbf16, #tpu.memory_space<vmem>>, vector<1x32x96xbf16>
    %24 = vector.shape_cast %23 : vector<1x32x96xbf16> to vector<32x96xbf16>
    %cst_9 = arith.constant dense<0.000000e+00> : vector<8x96xf32>
    %25 = tpu.matmul %22, %24, %cst_9 {dimension_numbers = #tpu.dot_dimension_numbers<[1], [0], [0], [1], [0, 0, 1, 1], [], []>} : vector<8x32xbf16>, vector<32x96xbf16>, vector<8x96xf32> -> vector<8x96xf32>
    %26 = vector.broadcast %14 : vector<1x96xf32> to vector<8x96xf32>
    %27 = arith.addf %25, %26 : vector<8x96xf32>
    %28 = vector.extract_strided_slice %27 {offsets = [0, 0], sizes = [8, 8], strides = [1, 1]} : vector<8x96xf32> to vector<8x8xf32>
    %29 = arith.truncf %28 : vector<8x8xf32> to vector<8x8xbf16>
    %30 = vector.extract_strided_slice %27 {offsets = [0, 32], sizes = [8, 8], strides = [1, 1]} : vector<8x96xf32> to vector<8x8xf32>
    %31 = arith.truncf %30 : vector<8x8xf32> to vector<8x8xbf16>
    %32 = vector.extract_strided_slice %27 {offsets = [0, 64], sizes = [8, 8], strides = [1, 1]} : vector<8x96xf32> to vector<8x8xf32>
    %33 = arith.truncf %32 : vector<8x8xf32> to vector<8x8xbf16>
    %cst_10 = arith.constant dense<0.000000e+00> : vector<8x8xf32>
    %34 = tpu.matmul %29, %31, %cst_10 {dimension_numbers = #tpu.dot_dimension_numbers<[1], [1], [0], [0], [0, 0, 1, 0], [], []>} : vector<8x8xbf16>, vector<8x8xbf16>, vector<8x8xf32> -> vector<8x8xf32>
    %cst_11 = arith.constant 0.353553385 : f32
    %35 = vector.broadcast %cst_11 : f32 to vector<8x8xf32>
    %36 = arith.mulf %34, %35 : vector<8x8xf32>
    %37 = arith.addf %36, %11 : vector<8x8xf32>
    %cst_12 = arith.constant dense<0xFF800000> : vector<8xf32>
    %38 = vector.multi_reduction <maximumf>, %37, %cst_12 [1] : vector<8x8xf32> to vector<8xf32>
    %39 = vector.shape_cast %38 : vector<8xf32> to vector<8x1xf32>
    %40 = vector.broadcast %39 : vector<8x1xf32> to vector<8x8xf32>
    %41 = arith.subf %37, %40 : vector<8x8xf32>
    %42 = math.exp %41 : vector<8x8xf32>
    %cst_13 = arith.constant dense<0.000000e+00> : vector<8xf32>
    %43 = vector.multi_reduction <add>, %42, %cst_13 [1] : vector<8x8xf32> to vector<8xf32>
    %44 = vector.shape_cast %43 : vector<8xf32> to vector<8x1xf32>
    %45 = vector.broadcast %44 : vector<8x1xf32> to vector<8x8xf32>
    %46 = arith.divf %42, %45 : vector<8x8xf32>
    %47 = arith.truncf %46 : vector<8x8xf32> to vector<8x8xbf16>
    %cst_14 = arith.constant dense<0.000000e+00> : vector<8x8xf32>
    %48 = tpu.matmul %47, %33, %cst_14 {dimension_numbers = #tpu.dot_dimension_numbers<[1], [0], [0], [1], [0, 0, 1, 1], [], []>} : vector<8x8xbf16>, vector<8x8xbf16>, vector<8x8xf32> -> vector<8x8xf32>
    %49 = vector.extract_strided_slice %27 {offsets = [0, 8], sizes = [8, 8], strides = [1, 1]} : vector<8x96xf32> to vector<8x8xf32>
    %50 = arith.truncf %49 : vector<8x8xf32> to vector<8x8xbf16>
    %51 = vector.extract_strided_slice %27 {offsets = [0, 40], sizes = [8, 8], strides = [1, 1]} : vector<8x96xf32> to vector<8x8xf32>
    %52 = arith.truncf %51 : vector<8x8xf32> to vector<8x8xbf16>
    %53 = vector.extract_strided_slice %27 {offsets = [0, 72], sizes = [8, 8], strides = [1, 1]} : vector<8x96xf32> to vector<8x8xf32>
    %54 = arith.truncf %53 : vector<8x8xf32> to vector<8x8xbf16>
    %cst_15 = arith.constant dense<0.000000e+00> : vector<8x8xf32>
    %55 = tpu.matmul %50, %52, %cst_15 {dimension_numbers = #tpu.dot_dimension_numbers<[1], [1], [0], [0], [0, 0, 1, 0], [], []>} : vector<8x8xbf16>, vector<8x8xbf16>, vector<8x8xf32> -> vector<8x8xf32>
    %cst_16 = arith.constant 0.353553385 : f32
    %56 = vector.broadcast %cst_16 : f32 to vector<8x8xf32>
    %57 = arith.mulf %55, %56 : vector<8x8xf32>
    %58 = arith.addf %57, %11 : vector<8x8xf32>
    %cst_17 = arith.constant dense<0xFF800000> : vector<8xf32>
    %59 = vector.multi_reduction <maximumf>, %58, %cst_17 [1] : vector<8x8xf32> to vector<8xf32>
    %60 = vector.shape_cast %59 : vector<8xf32> to vector<8x1xf32>
    %61 = vector.broadcast %60 : vector<8x1xf32> to vector<8x8xf32>
    %62 = arith.subf %58, %61 : vector<8x8xf32>
    %63 = math.exp %62 : vector<8x8xf32>
    %cst_18 = arith.constant dense<0.000000e+00> : vector<8xf32>
    %64 = vector.multi_reduction <add>, %63, %cst_18 [1] : vector<8x8xf32> to vector<8xf32>
    %65 = vector.shape_cast %64 : vector<8xf32> to vector<8x1xf32>
    %66 = vector.broadcast %65 : vector<8x1xf32> to vector<8x8xf32>
    %67 = arith.divf %63, %66 : vector<8x8xf32>
    %68 = arith.truncf %67 : vector<8x8xf32> to vector<8x8xbf16>
    %cst_19 = arith.constant dense<0.000000e+00> : vector<8x8xf32>
    %69 = tpu.matmul %68, %54, %cst_19 {dimension_numbers = #tpu.dot_dimension_numbers<[1], [0], [0], [1], [0, 0, 1, 1], [], []>} : vector<8x8xbf16>, vector<8x8xbf16>, vector<8x8xf32> -> vector<8x8xf32>
    %70 = vector.extract_strided_slice %27 {offsets = [0, 16], sizes = [8, 8], strides = [1, 1]} : vector<8x96xf32> to vector<8x8xf32>
    %71 = arith.truncf %70 : vector<8x8xf32> to vector<8x8xbf16>
    %72 = vector.extract_strided_slice %27 {offsets = [0, 48], sizes = [8, 8], strides = [1, 1]} : vector<8x96xf32> to vector<8x8xf32>
    %73 = arith.truncf %72 : vector<8x8xf32> to vector<8x8xbf16>
    %74 = vector.extract_strided_slice %27 {offsets = [0, 80], sizes = [8, 8], strides = [1, 1]} : vector<8x96xf32> to vector<8x8xf32>
    %75 = arith.truncf %74 : vector<8x8xf32> to vector<8x8xbf16>
    %cst_20 = arith.constant dense<0.000000e+00> : vector<8x8xf32>
    %76 = tpu.matmul %71, %73, %cst_20 {dimension_numbers = #tpu.dot_dimension_numbers<[1], [1], [0], [0], [0, 0, 1, 0], [], []>} : vector<8x8xbf16>, vector<8x8xbf16>, vector<8x8xf32> -> vector<8x8xf32>
    %cst_21 = arith.constant 0.353553385 : f32
    %77 = vector.broadcast %cst_21 : f32 to vector<8x8xf32>
    %78 = arith.mulf %76, %77 : vector<8x8xf32>
    %79 = arith.addf %78, %11 : vector<8x8xf32>
    %cst_22 = arith.constant dense<0xFF800000> : vector<8xf32>
    %80 = vector.multi_reduction <maximumf>, %79, %cst_22 [1] : vector<8x8xf32> to vector<8xf32>
    %81 = vector.shape_cast %80 : vector<8xf32> to vector<8x1xf32>
    %82 = vector.broadcast %81 : vector<8x1xf32> to vector<8x8xf32>
    %83 = arith.subf %79, %82 : vector<8x8xf32>
    %84 = math.exp %83 : vector<8x8xf32>
    %cst_23 = arith.constant dense<0.000000e+00> : vector<8xf32>
    %85 = vector.multi_reduction <add>, %84, %cst_23 [1] : vector<8x8xf32> to vector<8xf32>
    %86 = vector.shape_cast %85 : vector<8xf32> to vector<8x1xf32>
    %87 = vector.broadcast %86 : vector<8x1xf32> to vector<8x8xf32>
    %88 = arith.divf %84, %87 : vector<8x8xf32>
    %89 = arith.truncf %88 : vector<8x8xf32> to vector<8x8xbf16>
    %cst_24 = arith.constant dense<0.000000e+00> : vector<8x8xf32>
    %90 = tpu.matmul %89, %75, %cst_24 {dimension_numbers = #tpu.dot_dimension_numbers<[1], [0], [0], [1], [0, 0, 1, 1], [], []>} : vector<8x8xbf16>, vector<8x8xbf16>, vector<8x8xf32> -> vector<8x8xf32>
    %91 = vector.extract_strided_slice %27 {offsets = [0, 24], sizes = [8, 8], strides = [1, 1]} : vector<8x96xf32> to vector<8x8xf32>
    %92 = arith.truncf %91 : vector<8x8xf32> to vector<8x8xbf16>
    %93 = vector.extract_strided_slice %27 {offsets = [0, 56], sizes = [8, 8], strides = [1, 1]} : vector<8x96xf32> to vector<8x8xf32>
    %94 = arith.truncf %93 : vector<8x8xf32> to vector<8x8xbf16>
    %95 = vector.extract_strided_slice %27 {offsets = [0, 88], sizes = [8, 8], strides = [1, 1]} : vector<8x96xf32> to vector<8x8xf32>
    %96 = arith.truncf %95 : vector<8x8xf32> to vector<8x8xbf16>
    %cst_25 = arith.constant dense<0.000000e+00> : vector<8x8xf32>
    %97 = tpu.matmul %92, %94, %cst_25 {dimension_numbers = #tpu.dot_dimension_numbers<[1], [1], [0], [0], [0, 0, 1, 0], [], []>} : vector<8x8xbf16>, vector<8x8xbf16>, vector<8x8xf32> -> vector<8x8xf32>
    %cst_26 = arith.constant 0.353553385 : f32
    %98 = vector.broadcast %cst_26 : f32 to vector<8x8xf32>
    %99 = arith.mulf %97, %98 : vector<8x8xf32>
    %100 = arith.addf %99, %11 : vector<8x8xf32>
    %cst_27 = arith.constant dense<0xFF800000> : vector<8xf32>
    %101 = vector.multi_reduction <maximumf>, %100, %cst_27 [1] : vector<8x8xf32> to vector<8xf32>
    %102 = vector.shape_cast %101 : vector<8xf32> to vector<8x1xf32>
    %103 = vector.broadcast %102 : vector<8x1xf32> to vector<8x8xf32>
    %104 = arith.subf %100, %103 : vector<8x8xf32>
    %105 = math.exp %104 : vector<8x8xf32>
    %cst_28 = arith.constant dense<0.000000e+00> : vector<8xf32>
    %106 = vector.multi_reduction <add>, %105, %cst_28 [1] : vector<8x8xf32> to vector<8xf32>
    %107 = vector.shape_cast %106 : vector<8xf32> to vector<8x1xf32>
    %108 = vector.broadcast %107 : vector<8x1xf32> to vector<8x8xf32>
    %109 = arith.divf %105, %108 : vector<8x8xf32>
    %110 = arith.truncf %109 : vector<8x8xf32> to vector<8x8xbf16>
    %cst_29 = arith.constant dense<0.000000e+00> : vector<8x8xf32>
    %111 = tpu.matmul %110, %96, %cst_29 {dimension_numbers = #tpu.dot_dimension_numbers<[1], [0], [0], [1], [0, 0, 1, 1], [], []>} : vector<8x8xbf16>, vector<8x8xbf16>, vector<8x8xf32> -> vector<8x8xf32>
    %112 = tpu.concatenate %48, %69, %90, %111 in 1 : vector<8x8xf32>, vector<8x8xf32>, vector<8x8xf32>, vector<8x8xf32> -> vector<8x32xf32>
    %113 = arith.truncf %112 : vector<8x32xf32> to vector<8x32xbf16>
    %c0_30 = arith.constant 0 : index
    %c0_31 = arith.constant 0 : index
    %c0_32 = arith.constant 0 : index
    %114 = vector.load %arg6[%c0_30, %c0_31, %c0_32] : memref<1x32x32xbf16, #tpu.memory_space<vmem>>, vector<1x32x32xbf16>
    %115 = vector.shape_cast %114 : vector<1x32x32xbf16> to vector<32x32xbf16>
    %cst_33 = arith.constant dense<0.000000e+00> : vector<8x32xf32>
    %116 = tpu.matmul %113, %115, %cst_33 {dimension_numbers = #tpu.dot_dimension_numbers<[1], [0], [0], [1], [0, 0, 1, 1], [], []>} : vector<8x32xbf16>, vector<32x32xbf16>, vector<8x32xf32> -> vector<8x32xf32>
    %117 = arith.addf %3, %116 : vector<8x32xf32>
    %118 = vector.broadcast %15 : vector<1x32xf32> to vector<8x32xf32>
    %119 = arith.addf %117, %118 : vector<8x32xf32>
    %cst_34 = arith.constant dense<0.000000e+00> : vector<8xf32>
    %120 = vector.multi_reduction <add>, %119, %cst_34 [1] : vector<8x32xf32> to vector<8xf32>
    %121 = vector.shape_cast %120 : vector<8xf32> to vector<8x1xf32>
    %cst_35 = arith.constant 3.200000e+01 : f32
    %122 = vector.broadcast %cst_35 : f32 to vector<8x1xf32>
    %123 = arith.divf %121, %122 : vector<8x1xf32>
    %124 = vector.broadcast %123 : vector<8x1xf32> to vector<8x32xf32>
    %125 = arith.subf %119, %124 : vector<8x32xf32>
    %126 = arith.mulf %125, %125 : vector<8x32xf32>
    %cst_36 = arith.constant dense<0.000000e+00> : vector<8xf32>
    %127 = vector.multi_reduction <add>, %126, %cst_36 [1] : vector<8x32xf32> to vector<8xf32>
    %128 = vector.shape_cast %127 : vector<8xf32> to vector<8x1xf32>
    %cst_37 = arith.constant 3.200000e+01 : f32
    %129 = vector.broadcast %cst_37 : f32 to vector<8x1xf32>
    %130 = arith.divf %128, %129 : vector<8x1xf32>
    %cst_38 = arith.constant 9.99999996E-13 : f32
    %131 = vector.broadcast %cst_38 : f32 to vector<8x1xf32>
    %132 = arith.addf %130, %131 : vector<8x1xf32>
    %133 = math.rsqrt %132 : vector<8x1xf32>
    %134 = vector.broadcast %133 : vector<8x1xf32> to vector<8x32xf32>
    %135 = arith.mulf %125, %134 : vector<8x32xf32>
    %136 = vector.broadcast %16 : vector<1x32xf32> to vector<8x32xf32>
    %137 = arith.mulf %135, %136 : vector<8x32xf32>
    %138 = vector.broadcast %17 : vector<1x32xf32> to vector<8x32xf32>
    %139 = arith.addf %137, %138 : vector<8x32xf32>
    %140 = arith.truncf %139 : vector<8x32xf32> to vector<8x32xbf16>
    %c0_39 = arith.constant 0 : index
    %c0_40 = arith.constant 0 : index
    %c0_41 = arith.constant 0 : index
    %141 = vector.load %arg7[%c0_39, %c0_40, %c0_41] : memref<1x32x64xbf16, #tpu.memory_space<vmem>>, vector<1x32x64xbf16>
    %142 = vector.shape_cast %141 : vector<1x32x64xbf16> to vector<32x64xbf16>
    %cst_42 = arith.constant dense<0.000000e+00> : vector<8x64xf32>
    %143 = tpu.matmul %140, %142, %cst_42 {dimension_numbers = #tpu.dot_dimension_numbers<[1], [0], [0], [1], [0, 0, 1, 1], [], []>} : vector<8x32xbf16>, vector<32x64xbf16>, vector<8x64xf32> -> vector<8x64xf32>
    %144 = vector.broadcast %18 : vector<1x64xf32> to vector<8x64xf32>
    %145 = arith.addf %143, %144 : vector<8x64xf32>
    %cst_43 = arith.constant 5.000000e-01 : f32
    %146 = vector.broadcast %cst_43 : f32 to vector<8x64xf32>
    %147 = arith.mulf %146, %145 : vector<8x64xf32>
    %cst_44 = arith.constant 4.471500e-02 : f32
    %148 = vector.broadcast %cst_44 : f32 to vector<8x64xf32>
    %149 = arith.mulf %148, %145 : vector<8x64xf32>
    %150 = arith.mulf %149, %145 : vector<8x64xf32>
    %151 = arith.mulf %150, %145 : vector<8x64xf32>
    %152 = arith.addf %145, %151 : vector<8x64xf32>
    %cst_45 = arith.constant 0.797884583 : f32
    %153 = vector.broadcast %cst_45 : f32 to vector<8x64xf32>
    %154 = arith.mulf %153, %152 : vector<8x64xf32>
    %155 = math.tanh %154 : vector<8x64xf32>
    %cst_46 = arith.constant 1.000000e+00 : f32
    %156 = vector.broadcast %cst_46 : f32 to vector<8x64xf32>
    %157 = arith.addf %156, %155 : vector<8x64xf32>
    %158 = arith.mulf %147, %157 : vector<8x64xf32>
    %159 = arith.truncf %158 : vector<8x64xf32> to vector<8x64xbf16>
    %c0_47 = arith.constant 0 : index
    %c0_48 = arith.constant 0 : index
    %c0_49 = arith.constant 0 : index
    %160 = vector.load %arg8[%c0_47, %c0_48, %c0_49] : memref<1x64x32xbf16, #tpu.memory_space<vmem>>, vector<1x64x32xbf16>
    %161 = vector.shape_cast %160 : vector<1x64x32xbf16> to vector<64x32xbf16>
    %cst_50 = arith.constant dense<0.000000e+00> : vector<8x32xf32>
    %162 = tpu.matmul %159, %161, %cst_50 {dimension_numbers = #tpu.dot_dimension_numbers<[1], [0], [0], [1], [0, 0, 1, 1], [], []>} : vector<8x64xbf16>, vector<64x32xbf16>, vector<8x32xf32> -> vector<8x32xf32>
    %163 = vector.broadcast %19 : vector<1x32xf32> to vector<8x32xf32>
    %164 = arith.addf %162, %163 : vector<8x32xf32>
    %165 = arith.addf %139, %164 : vector<8x32xf32>
    %cst_51 = arith.constant dense<0.000000e+00> : vector<8xf32>
    %166 = vector.multi_reduction <add>, %165, %cst_51 [1] : vector<8x32xf32> to vector<8xf32>
    %167 = vector.shape_cast %166 : vector<8xf32> to vector<8x1xf32>
    %cst_52 = arith.constant 3.200000e+01 : f32
    %168 = vector.broadcast %cst_52 : f32 to vector<8x1xf32>
    %169 = arith.divf %167, %168 : vector<8x1xf32>
    %170 = vector.broadcast %169 : vector<8x1xf32> to vector<8x32xf32>
    %171 = arith.subf %165, %170 : vector<8x32xf32>
    %172 = arith.mulf %171, %171 : vector<8x32xf32>
    %cst_53 = arith.constant dense<0.000000e+00> : vector<8xf32>
    %173 = vector.multi_reduction <add>, %172, %cst_53 [1] : vector<8x32xf32> to vector<8xf32>
    %174 = vector.shape_cast %173 : vector<8xf32> to vector<8x1xf32>
    %cst_54 = arith.constant 3.200000e+01 : f32
    %175 = vector.broadcast %cst_54 : f32 to vector<8x1xf32>
    %176 = arith.divf %174, %175 : vector<8x1xf32>
    %cst_55 = arith.constant 9.99999996E-13 : f32
    %177 = vector.broadcast %cst_55 : f32 to vector<8x1xf32>
    %178 = arith.addf %176, %177 : vector<8x1xf32>
    %179 = math.rsqrt %178 : vector<8x1xf32>
    %180 = vector.broadcast %179 : vector<8x1xf32> to vector<8x32xf32>
    %181 = arith.mulf %171, %180 : vector<8x32xf32>
    %182 = vector.broadcast %20 : vector<1x32xf32> to vector<8x32xf32>
    %183 = arith.mulf %181, %182 : vector<8x32xf32>
    %184 = vector.broadcast %21 : vector<1x32xf32> to vector<8x32xf32>
    %185 = arith.addf %183, %184 : vector<8x32xf32>
    %c0_56 = arith.constant 0 : index
    %c0_57 = arith.constant 0 : index
    %186 = vector.load %arg10[%c0_56, %c0_57] : memref<8x32xf32, #tpu.memory_space<vmem>>, vector<8x32xf32>
    tpu.vector_store %arg10[%c0_56, %c0_57], %185 {strides = array<i32>} : memref<8x32xf32, #tpu.memory_space<vmem>>, vector<8x32xf32>,
    return
  }
  func.func @transform_0(%arg0: i32, %arg1: i32, %arg2: memref<2xi32, #tpu.memory_space<smem>>) -> (i32, i32) {
    %c0_i32 = arith.constant 0 : i32
    %c0_i32_0 = arith.constant 0 : i32
    return %arg0, %c0_i32 : i32, i32
  }
  func.func @transform_1(%arg0: i32, %arg1: i32, %arg2: memref<2xi32, #tpu.memory_space<smem>>) -> (i32, i32) {
    %c0_i32 = arith.constant 0 : i32
    %c0_i32_0 = arith.constant 0 : i32
    %c0_i32_1 = arith.constant 0 : i32
    return %c0_i32, %c0_i32_0 : i32, i32
  }
  func.func @transform_2(%arg0: i32, %arg1: i32, %arg2: memref<2xi32, #tpu.memory_space<smem>>) -> (i32, i32, i32) {
    %c0_i32 = arith.constant 0 : i32
    %c0_i32_0 = arith.constant 0 : i32
    %c0_i32_1 = arith.constant 0 : i32
    return %arg1, %c0_i32, %c0_i32_0 : i32, i32, i32
  }
  func.func @transform_3(%arg0: i32, %arg1: i32, %arg2: memref<2xi32, #tpu.memory_space<smem>>) -> (i32, i32, i32) {
    %c0_i32 = arith.constant 0 : i32
    %c0_i32_0 = arith.constant 0 : i32
    %c0_i32_1 = arith.constant 0 : i32
    return %arg1, %c0_i32, %c0_i32_0 : i32, i32, i32
  }
  func.func @transform_4(%arg0: i32, %arg1: i32, %arg2: memref<2xi32, #tpu.memory_space<smem>>) -> (i32, i32, i32) {
    %c0_i32 = arith.constant 0 : i32
    %c0_i32_0 = arith.constant 0 : i32
    %c0_i32_1 = arith.constant 0 : i32
    return %arg1, %c0_i32, %c0_i32_0 : i32, i32, i32
  }
  func.func @transform_5(%arg0: i32, %arg1: i32, %arg2: memref<2xi32, #tpu.memory_space<smem>>) -> (i32, i32, i32) {
    %c0_i32 = arith.constant 0 : i32
    %c0_i32_0 = arith.constant 0 : i32
    %c0_i32_1 = arith.constant 0 : i32
    return %arg1, %c0_i32, %c0_i32_0 : i32, i32, i32
  }
  func.func @transform_6(%arg0: i32, %arg1: i32, %arg2: memref<2xi32, #tpu.memory_space<smem>>) -> (i32, i32, i32) {
    %c0_i32 = arith.constant 0 : i32
    %c0_i32_0 = arith.constant 0 : i32
    %c0_i32_1 = arith.constant 0 : i32
    return %arg1, %c0_i32, %c0_i32_0 : i32, i32, i32
  }
  func.func @transform_7(%arg0: i32, %arg1: i32, %arg2: memref<2xi32, #tpu.memory_space<smem>>) -> (i32, i32) {
    %c0_i32 = arith.constant 0 : i32
    %c0_i32_0 = arith.constant 0 : i32
    return %arg0, %c0_i32 : i32, i32
  }
}

</mosaic_0001>

<llo_original>
// kernel: bert_forward.1
$region0: #{bert_forward.1}
  #allocation0 [shape = 'u32[]', space=smem, size = 0x4, offset = 0x4, fixed_abs, tag = 'smem constant byte address 0x4 - core index']
  #allocation1 [shape = 'u32[72,128]{1,0:T(1,128)}', space=vmem, size = 0x9000, scoped, tag = 'internal scratch']
  #allocation2 [shape = 's32[1]{0}', space=sflag, size = 0x4, scoped, tag = 'scoped memory for bert_forward.1']
  #allocation3 [shape = 'u8[512]{0}', space=smem, size = 0x200, scoped, tag = 'prefetched SMEM operand 0']
  %s0 = inlined_call_operand.vmem [shape: s32[2], index: 0, kind: input, shape index: {}]
  %s1 = inlined_call_operand.vmem [shape: f32[16,32], index: 1, kind: input, shape index: {}]
  %s2 = inlined_call_operand.vmem [shape: f32[2,32], index: 2, kind: input, shape index: {}]
  %s3 = inlined_call_operand.vmem [shape: bf16[2,32,96], index: 3, kind: input, shape index: {}]
  %s4 = inlined_call_operand.vmem [shape: bf16[2,32,32], index: 4, kind: input, shape index: {}]
  %s5 = inlined_call_operand.vmem [shape: bf16[2,32,64], index: 5, kind: input, shape index: {}]
  %s6 = inlined_call_operand.vmem [shape: bf16[2,64,32], index: 6, kind: input, shape index: {}]
  %s7 = inlined_call_operand.vmem [shape: f32[2,8,96], index: 7, kind: input, shape index: {}]
  %s8 = inlined_call_operand.hbm [shape: f32[16,32], index: 8, kind: output, shape index: {}]
  %s9 = sld [smem:[#allocation0]]
  $region65: #{bert_forward.1} parent=0
    _
  %s11 = ssub.s32 1, %s9
  %s12 = scalar_select 0, %s11, %s9
  %s14 = sshll.u32 %s0, 4
  %s15 = int_to_ptr.vmem [resolvable:$true] %s14
  %17 = dma.vmem_to_smem %s15, 16, [#allocation3], [#allocation2]
  %19 = dma.done [#allocation2], 16
  %20 = sfence
  $region1: #{bert_forward.1} parent=0
    #allocation4 [shape = 'u8[8192]{0}', space=vmem, size = 0x2000, scoped, tag = 'output window, operand 0']
    #allocation5 [shape = 's32[2]{0}', space=sflag, size = 0x8, scoped, tag = 'scoped memory for bert_forward.1']
    %21 = vsyncpa [#allocation5], 0
    %s22 = scalar_lea.sflag [#allocation5], 1
    %23 = vsyncpa %s22, 0
    loop: start=0, step=1, limit=6
    $region2: #{bert_forward.1} parent=1 // loop_pre_header
      _
    $region3: #{bert_forward.1} parent=1 // loop_header
      %s25 = sphi 0, %s29
      %p26 = scmp.ge.s32.totalorder %s25, 6
      %s32 = sphi 0, %s44
      %s33 = sphi 0, %s40
      %s34 = sphi 0, %s32
      %s35 = sphi 0, %s33
      %s36 = sphi 0, %s34
      %s37 = sphi 0, %s35
      %s47 = sphi 0, %s49
      %s50 = sphi 0, %s47
      %s51 = sphi 0, %s50
      %s67 = sphi 0, %s51
      %s71 = sphi 0, %s71
      %s73 = sphi 0, %s71
      %s74 = sphi 0, %s73
      %s88 = sphi 0, %s74
      %s94 = sphi 0, %s96
      %s97 = sphi 0, %s94
      %s98 = sphi 0, %s97
      %s114 = sphi 0, %s98
      %s120 = sphi 0, %s122
      %s123 = sphi 0, %s120
      %s124 = sphi 0, %s123
      %s140 = sphi 0, %s124
      %s146 = sphi 0, %s148
      %s149 = sphi 0, %s146
      %s150 = sphi 0, %s149
      %s166 = sphi 0, %s150
      %s172 = sphi 0, %s174
      %s175 = sphi 0, %s172
      %s176 = sphi 0, %s175
      %s192 = sphi 0, %s176
      %s198 = sphi 0, %s200
      %s201 = sphi 0, %s198
      %s202 = sphi 0, %s201
      %s218 = sphi 0, %s202
      %s224 = sphi 0, %s226
      %s227 = sphi 0, %s224
      %s228 = sphi 0, %s227
      %s244 = sphi 0, %s228
    $region4: #{bert_forward.1} parent=1 // loop_header_branch
      %28 = sbr.rel (%p26) target = $region8
    $region5: #{bert_forward.1} parent=1 // loop_body
      %s30 = ssub.s32 %s25, 1
      %s31 = ssub.s32 %s25, 2
      %s38 = sadd.s32 1, %s33
      %p39 = scmp.ge.s32.totalorder %s38, 2
      %s40 = scalar_select %p39, 0, %s38
      %s41 = sadd.s32 1, %s32
      %s42 = scalar_select %p39, %s41, %s32
      %p43 = scmp.ge.s32.totalorder %s42, 2
      %s44 = scalar_select %p43, 0, %s42
      %s45 = ssub.s32 %s32, %s44
      %p46 = scmp.eq.s32.totalorder %s45, 0
      %s48 = sadd.s32 %s47, 1
      %s49 = scalar_select %p46, %s47, %s48
      %p52 = pneg %p46
      %p53 = scmp.eq.s32.totalorder %s25, 3
      %p54 = por %p52, %p53
      %p55 = scmp.ne.s32.totalorder %s47, %s50
      %p56 = scmp.eq.s32.totalorder %s25, 0
      %p57 = por %p55, %p56
      %p58 = scmp.ne.s32.totalorder %s47, %s50
      %p59 = scmp.eq.s32.totalorder %s30, 3
      %p60 = por %p58, %p59
      %p61 = scmp.ne.s32.totalorder %s50, %s51
      %p62 = scmp.eq.s32.totalorder %s30, 0
      %p63 = por %p61, %p62
      %p64 = scmp.ne.s32.totalorder %s50, %s51
      %p65 = scmp.eq.s32.totalorder %s31, 3
      %p66 = por %p64, %p65
      %p68 = scmp.ne.s32.totalorder %s51, %s67
      %p69 = scmp.eq.s32.totalorder %s31, 0
      %p70 = por %p68, %p69
      %s72 = sadd.s32 %s71, 1
      %p75 = scmp.eq.s32.totalorder %s25, 3
      %p76 = scmp.ne.s32.totalorder %s71, %s73
      %p77 = scmp.eq.s32.totalorder %s25, 0
      %p78 = por %p76, %p77
      %p79 = scmp.ne.s32.totalorder %s71, %s73
      %p80 = scmp.eq.s32.totalorder %s30, 3
      %p81 = por %p79, %p80
      %p82 = scmp.ne.s32.totalorder %s73, %s74
      %p83 = scmp.eq.s32.totalorder %s30, 0
      %p84 = por %p82, %p83
      %p85 = scmp.ne.s32.totalorder %s73, %s74
      %p86 = scmp.eq.s32.totalorder %s31, 3
      %p87 = por %p85, %p86
      %p89 = scmp.ne.s32.totalorder %s74, %s88
      %p90 = scmp.eq.s32.totalorder %s31, 0
      %p91 = por %p89, %p90
      %s92 = ssub.s32 %s33, %s40
      %p93 = scmp.eq.s32.totalorder %s92, 0
      %s95 = sadd.s32 %s94, 1
      %s96 = scalar_select %p93, %s94, %s95
      %p99 = pneg %p93
      %p100 = scmp.eq.s32.totalorder %s25, 3
      %p101 = por %p99, %p100
      %p102 = scmp.ne.s32.totalorder %s94, %s97
      %p103 = scmp.eq.s32.totalorder %s25, 0
      %p104 = por %p102, %p103
      %p105 = scmp.ne.s32.totalorder %s94, %s97
      %p106 = scmp.eq.s32.totalorder %s30, 3
      %p107 = por %p105, %p106
      %p108 = scmp.ne.s32.totalorder %s97, %s98
      %p109 = scmp.eq.s32.totalorder %s30, 0
      %p110 = por %p108, %p109
      %p111 = scmp.ne.s32.totalorder %s97, %s98
      %p112 = scmp.eq.s32.totalorder %s31, 3
      %p113 = por %p111, %p112
      %p115 = scmp.ne.s32.totalorder %s98, %s114
      %p116 = scmp.eq.s32.totalorder %s31, 0
      %p117 = por %p115, %p116
      %s118 = ssub.s32 %s33, %s40
      %p119 = scmp.eq.s32.totalorder %s118, 0
      %s121 = sadd.s32 %s120, 1
      %s122 = scalar_select %p119, %s120, %s121
      %p125 = pneg %p119
      %p126 = scmp.eq.s32.totalorder %s25, 3
      %p127 = por %p125, %p126
      %p128 = scmp.ne.s32.totalorder %s120, %s123
      %p129 = scmp.eq.s32.totalorder %s25, 0
      %p130 = por %p128, %p129
      %p131 = scmp.ne.s32.totalorder %s120, %s123
      %p132 = scmp.eq.s32.totalorder %s30, 3
      %p133 = por %p131, %p132
      %p134 = scmp.ne.s32.totalorder %s123, %s124
      %p135 = scmp.eq.s32.totalorder %s30, 0
      %p136 = por %p134, %p135
      %p137 = scmp.ne.s32.totalorder %s123, %s124
      %p138 = scmp.eq.s32.totalorder %s31, 3
      %p139 = por %p137, %p138
      %p141 = scmp.ne.s32.totalorder %s124, %s140
      %p142 = scmp.eq.s32.totalorder %s31, 0
      %p143 = por %p141, %p142
      %s144 = ssub.s32 %s33, %s40
      %p145 = scmp.eq.s32.totalorder %s144, 0
      %s147 = sadd.s32 %s146, 1
      %s148 = scalar_select %p145, %s146, %s147
      %p151 = pneg %p145
      %p152 = scmp.eq.s32.totalorder %s25, 3
      %p153 = por %p151, %p152
      %p154 = scmp.ne.s32.totalorder %s146, %s149
      %p155 = scmp.eq.s32.totalorder %s25, 0
      %p156 = por %p154, %p155
      %p157 = scmp.ne.s32.totalorder %s146, %s149
      %p158 = scmp.eq.s32.totalorder %s30, 3
      %p159 = por %p157, %p158
      %p160 = scmp.ne.s32.totalorder %s149, %s150
      %p161 = scmp.eq.s32.totalorder %s30, 0
      %p162 = por %p160, %p161
      %p163 = scmp.ne.s32.totalorder %s149, %s150
      %p164 = scmp.eq.s32.totalorder %s31, 3
      %p165 = por %p163, %p164
      %p167 = scmp.ne.s32.totalorder %s150, %s166
      %p168 = scmp.eq.s32.totalorder %s31, 0
      %p169 = por %p167, %p168
      %s170 = ssub.s32 %s33, %s40
      %p171 = scmp.eq.s32.totalorder %s170, 0
      %s173 = sadd.s32 %s172, 1
      %s174 = scalar_select %p171, %s172, %s173
      %p177 = pneg %p171
      %p178 = scmp.eq.s32.totalorder %s25, 3
      %p179 = por %p177, %p178
      %p180 = scmp.ne.s32.totalorder %s172, %s175
      %p181 = scmp.eq.s32.totalorder %s25, 0
      %p182 = por %p180, %p181
      %p183 = scmp.ne.s32.totalorder %s172, %s175
      %p184 = scmp.eq.s32.totalorder %s30, 3
      %p185 = por %p183, %p184
      %p186 = scmp.ne.s32.totalorder %s175, %s176
      %p187 = scmp.eq.s32.totalorder %s30, 0
      %p188 = por %p186, %p187
      %p189 = scmp.ne.s32.totalorder %s175, %s176
      %p190 = scmp.eq.s32.totalorder %s31, 3
      %p191 = por %p189, %p190
      %p193 = scmp.ne.s32.totalorder %s176, %s192
      %p194 = scmp.eq.s32.totalorder %s31, 0
      %p195 = por %p193, %p194
      %s196 = ssub.s32 %s33, %s40
      %p197 = scmp.eq.s32.totalorder %s196, 0
      %s199 = sadd.s32 %s198, 1
      %s200 = scalar_select %p197, %s198, %s199
      %p203 = pneg %p197
      %p204 = scmp.eq.s32.totalorder %s25, 3
      %p205 = por %p203, %p204
      %p206 = scmp.ne.s32.totalorder %s198, %s201
      %p207 = scmp.eq.s32.totalorder %s25, 0
      %p208 = por %p206, %p207
      %p209 = scmp.ne.s32.totalorder %s198, %s201
      %p210 = scmp.eq.s32.totalorder %s30, 3
      %p211 = por %p209, %p210
      %p212 = scmp.ne.s32.totalorder %s201, %s202
      %p213 = scmp.eq.s32.totalorder %s30, 0
      %p214 = por %p212, %p213
      %p215 = scmp.ne.s32.totalorder %s201, %s202
      %p216 = scmp.eq.s32.totalorder %s31, 3
      %p217 = por %p215, %p216
      %p219 = scmp.ne.s32.totalorder %s202, %s218
      %p220 = scmp.eq.s32.totalorder %s31, 0
      %p221 = por %p219, %p220
      %s222 = ssub.s32 %s32, %s44
      %p223 = scmp.eq.s32.totalorder %s222, 0
      %s225 = sadd.s32 %s224, 1
      %s226 = scalar_select %p223, %s224, %s225
      %p229 = pneg %p223
      %p230 = scmp.eq.s32.totalorder %s25, 3
      %p231 = por %p229, %p230
      %p232 = scmp.ne.s32.totalorder %s224, %s227
      %p233 = scmp.eq.s32.totalorder %s25, 0
      %p234 = por %p232, %p233
      %p235 = scmp.ne.s32.totalorder %s224, %s227
      %p236 = scmp.eq.s32.totalorder %s30, 3
      %p237 = por %p235, %p236
      %p238 = scmp.ne.s32.totalorder %s227, %s228
      %p239 = scmp.eq.s32.totalorder %s30, 0
      %p240 = por %p238, %p239
      %p241 = scmp.ne.s32.totalorder %s227, %s228
      %p242 = scmp.eq.s32.totalorder %s31, 3
      %p243 = por %p241, %p242
      %p245 = scmp.ne.s32.totalorder %s228, %s244
      %p246 = scmp.eq.s32.totalorder %s31, 0
      %p247 = por %p245, %p246
      %p248 = scmp.le.s32.totalorder 1, %s25
      %p249 = scmp.lt.s32.totalorder %s25, 5
      %p250 = pnand %p248, %p249
      %p251 = pneg %p250
      // Predicated region
      $region9: #{bert_forward.1} parent=5 // pred_check
        _
      $region10: #{bert_forward.1} parent=5 // pred_check_branch
        %253 = sbr.rel (%p250) target = $region12
      $region11: #{bert_forward.1} parent=5 // pred_region
        %s254 = ssub.s32 %s25, 1
        // Predicated region
        $region13: #{bert_forward.1} parent=11 // pred_check
          %p255 = pneg %p84
        $region14: #{bert_forward.1} parent=11 // pred_check_branch
          %257 = sbr.rel (%p255) target = $region16
        $region15: #{bert_forward.1} parent=11 // pred_region
          _
        $region16: #{bert_forward.1} parent=11 // pred_fallthru
          _
      $region12: #{bert_forward.1} parent=5 // pred_fallthru
        _
      %p258 = scmp.lt.s32.totalorder %s25, 4
      // Predicated region
      $region17: #{bert_forward.1} parent=5 // pred_check
        %p259 = pneg %p258
      $region18: #{bert_forward.1} parent=5 // pred_check_branch
        %261 = sbr.rel (%p259) target = $region20
      $region19: #{bert_forward.1} parent=5 // pred_region
        // Predicated region
        $region21: #{bert_forward.1} parent=19 // pred_check
          %p262 = pneg %p57
        $region22: #{bert_forward.1} parent=19 // pred_check_branch
          %264 = sbr.rel (%p262) target = $region24
        $region23: #{bert_forward.1} parent=19 // pred_region
          %p265 = scmp.lt.s32.totalorder %s32, 1
          %s266 = scalar_select %p265, %s32, 1
          %s267 = smul.addr %s266, 8
          %s268 = scalar_lea.vmem %s1, %s267
        $region24: #{bert_forward.1} parent=19 // pred_fallthru
          _
        // Predicated region
        $region25: #{bert_forward.1} parent=19 // pred_check
          %p269 = pneg %p104
        $region26: #{bert_forward.1} parent=19 // pred_check_branch
          %271 = sbr.rel (%p269) target = $region28
        $region27: #{bert_forward.1} parent=19 // pred_region
          %p272 = scmp.lt.s32.totalorder %s33, 1
          %s273 = scalar_select %p272, %s33, 1
          %s274 = smul.addr %s273, 4
          %s275 = smul.addr %s274, 4
          %s276 = scalar_lea.vmem %s3, %s275
        $region28: #{bert_forward.1} parent=19 // pred_fallthru
          _
        // Predicated region
        $region29: #{bert_forward.1} parent=19 // pred_check
          %p277 = pneg %p130
        $region30: #{bert_forward.1} parent=19 // pred_check_branch
          %279 = sbr.rel (%p277) target = $region32
        $region31: #{bert_forward.1} parent=19 // pred_region
          %p280 = scmp.lt.s32.totalorder %s33, 1
          %s281 = scalar_select %p280, %s33, 1
          %s282 = smul.addr %s281, 4
          %s283 = smul.addr %s282, 4
          %s284 = scalar_lea.vmem %s4, %s283
        $region32: #{bert_forward.1} parent=19 // pred_fallthru
          _
        // Predicated region
        $region33: #{bert_forward.1} parent=19 // pred_check
          %p285 = pneg %p156
        $region34: #{bert_forward.1} parent=19 // pred_check_branch
          %287 = sbr.rel (%p285) target = $region36
        $region35: #{bert_forward.1} parent=19 // pred_region
          %p288 = scmp.lt.s32.totalorder %s33, 1
          %s289 = scalar_select %p288, %s33, 1
          %s290 = smul.addr %s289, 4
          %s291 = smul.addr %s290, 4
          %s292 = scalar_lea.vmem %s5, %s291
        $region36: #{bert_forward.1} parent=19 // pred_fallthru
          _
        // Predicated region
        $region37: #{bert_forward.1} parent=19 // pred_check
          %p293 = pneg %p182
        $region38: #{bert_forward.1} parent=19 // pred_check_branch
          %295 = sbr.rel (%p293) target = $region40
        $region39: #{bert_forward.1} parent=19 // pred_region
          %p296 = scmp.lt.s32.totalorder %s33, 1
          %s297 = scalar_select %p296, %s33, 1
          %s298 = smul.addr %s297, 8
          %s299 = smul.addr %s298, 4
          %s300 = scalar_lea.vmem %s6, %s299
        $region40: #{bert_forward.1} parent=19 // pred_fallthru
          _
        // Predicated region
        $region41: #{bert_forward.1} parent=19 // pred_check
          %p301 = pneg %p208
        $region42: #{bert_forward.1} parent=19 // pred_check_branch
          %303 = sbr.rel (%p301) target = $region44
        $region43: #{bert_forward.1} parent=19 // pred_region
          %p304 = scmp.lt.s32.totalorder %s33, 1
          %s305 = scalar_select %p304, %s33, 1
          %s306 = smul.addr %s305, 8
          %s307 = scalar_lea.vmem %s7, %s306
        $region44: #{bert_forward.1} parent=19 // pred_fallthru
          _
      $region20: #{bert_forward.1} parent=5 // pred_fallthru
        _
      %p308 = scmp.le.s32.totalorder 1, %s25
      %p309 = scmp.lt.s32.totalorder %s25, 5
      %p310 = pnand %p308, %p309
      %p311 = pneg %p310
      // Predicated region
      $region45: #{bert_forward.1} parent=5 // pred_check
        _
      $region46: #{bert_forward.1} parent=5 // pred_check_branch
        %313 = sbr.rel (%p310) target = $region48
      $region47: #{bert_forward.1} parent=5 // pred_region
        %s314 = ssub.s32 %s25, 1
        %p315 = scmp.lt.s32.totalorder %s34, 1
        %s316 = scalar_select %p315, %s34, 1
        %s317 = smul.addr %s316, 8
        %s318 = scalar_lea.vmem %s1, %s317
        %p319 = pneg %p63
        %p320 = pneg %p60
        %p321 = pneg %p84
        %p322 = pneg %p81
        %p323 = scmp.lt.s32.totalorder %s35, 1
        %s324 = scalar_select %p323, %s35, 1
        %s325 = smul.addr %s324, 4
        %s326 = smul.addr %s325, 4
        %s327 = scalar_lea.vmem %s3, %s326
        %p328 = pneg %p110
        %p329 = pneg %p107
        %p330 = scmp.lt.s32.totalorder %s35, 1
        %s331 = scalar_select %p330, %s35, 1
        %s332 = smul.addr %s331, 4
        %s333 = smul.addr %s332, 4
        %s334 = scalar_lea.vmem %s4, %s333
        %p335 = pneg %p136
        %p336 = pneg %p133
        %p337 = scmp.lt.s32.totalorder %s35, 1
        %s338 = scalar_select %p337, %s35, 1
        %s339 = smul.addr %s338, 4
        %s340 = smul.addr %s339, 4
        %s341 = scalar_lea.vmem %s5, %s340
        %p342 = pneg %p162
        %p343 = pneg %p159
        %p344 = scmp.lt.s32.totalorder %s35, 1
        %s345 = scalar_select %p344, %s35, 1
        %s346 = smul.addr %s345, 8
        %s347 = smul.addr %s346, 4
        %s348 = scalar_lea.vmem %s6, %s347
        %p349 = pneg %p188
        %p350 = pneg %p185
        %p351 = scmp.lt.s32.totalorder %s35, 1
        %s352 = scalar_select %p351, %s35, 1
        %s353 = smul.addr %s352, 8
        %s354 = scalar_lea.vmem %s7, %s353
        %p355 = pneg %p214
        %p356 = pneg %p211
        %p357 = pneg %p240
        %p358 = pneg %p237
        %s359 = sand.u32 %s227, 1
        %s360 = scalar_lea.sflag [#allocation5], %s359
        %s361 = sand.u32 %s227, 1
        %s362 = smul.addr %s361, 8
        %s363 = scalar_lea.vmem [#allocation4], %s362
        %p364 = scmp.lt.s32.totalorder %s34, 1
        %s365 = scalar_select %p364, %s34, 1
        %s366 = smul.addr %s365, 8
        %s367 = scalar_lea.vmem %s1, %s366
        %p368 = scmp.lt.s32.totalorder %s35, 1
        %s369 = scalar_select %p368, %s35, 1
        %s370 = smul.addr %s369, 4
        %s371 = smul.addr %s370, 4
        %s372 = scalar_lea.vmem %s3, %s371
        %p373 = scmp.lt.s32.totalorder %s35, 1
        %s374 = scalar_select %p373, %s35, 1
        %s375 = smul.addr %s374, 4
        %s376 = smul.addr %s375, 4
        %s377 = scalar_lea.vmem %s4, %s376
        %p378 = scmp.lt.s32.totalorder %s35, 1
        %s379 = scalar_select %p378, %s35, 1
        %s380 = smul.addr %s379, 4
        %s381 = smul.addr %s380, 4
        %s382 = scalar_lea.vmem %s5, %s381
        %p383 = scmp.lt.s32.totalorder %s35, 1
        %s384 = scalar_select %p383, %s35, 1
        %s385 = smul.addr %s384, 8
        %s386 = smul.addr %s385, 4
        %s387 = scalar_lea.vmem %s6, %s386
        %p388 = scmp.lt.s32.totalorder %s35, 1
        %s389 = scalar_select %p388, %s35, 1
        %s390 = smul.addr %s389, 8
        %s391 = scalar_lea.vmem %s7, %s390
        %p393 = scmp.eq.s32.totalorder %s35, 0
        // Predicated region
        $region49: #{bert_forward.1} parent=47 // pred_check
          %p394 = pneg %p393
        $region50: #{bert_forward.1} parent=47 // pred_check_branch
          %396 = sbr.rel (%p394) target = $region52
        $region51: #{bert_forward.1} parent=47 // pred_region
          %v397 = vld [vmem:[%s367] sm:$0xff]
          %v398 = vld [vmem:[%s2] sm:$0x1]
          %v399 = vld [vmem:[%s2 + $0x1] sm:$0x1]
          %vm400 = vcmask 261120
          %v401 = vsel %vm400, %v397, 0.0
          %402 = vadd.xlane.f32.xlu0 %v401
          %v403 = vpop.xlane.xlu0 %402
          %v404 = vrcp.pop 32.0
          %v405 = vmul.f32 32.0, %v404
          %v406 = vsub.f32 1.0, %v405
          %v407 = vmul.f32 %v404, %v406
          %v408 = vadd.f32 %v404, %v407
          %vm409 = vweird.f32 %v404
          %v410 = vsel %vm409, %v404, %v408
          %v411 = vmul.f32 %v403, %v410
          %v412 = vsub.f32 %v397, %v411
          %v413 = vmul.f32 %v412, %v412
          %v414 = vsel %vm400, %v413, 0.0
          %415 = vadd.xlane.f32.xlu0 %v414
          %v416 = vpop.xlane.xlu0 %415
          %v417 = vmul.f32 %v416, %v410
          %v418 = vadd.f32 %v417, 1e-12
          %v419 = vrsqrt.pop %v418
          %v420 = vmul.f32 %v419, %v418
          %v421 = vmul.f32 %v420, %v419
          %v422 = vmul.f32 0.5, %v421
          %v423 = vsub.f32 1.5, %v422
          %v424 = vmul.f32 %v419, %v423
          %vm425 = vweird.f32 %v418
          %vm426 = vweird.f32 %v419
          %vm427 = vmor %vm425, %vm426
          %v428 = vsel %vm427, %v419, %v424
          %v429 = vmul.f32 %v412, %v428
          %v430 = vperm.slane %v398, 0
          %v431 = vmul.f32 %v429, %v430
          %v432 = vperm.slane %v399, 0
          %v433 = vadd.f32 %v431, %v432
          %434 = vst.msk [vmem:[%s363] sm:$0xff] %vm400, %v433
        $region52: #{bert_forward.1} parent=47 // pred_fallthru
          _
        %v435 = vld [vmem:[%s363] sm:$0xff]
        %v436 = vlaneseq
        %v437 = vand.u32 %v436, 127
        %s438 = sld [smem:[#allocation3 + %s34]]
        %v439 = vstv %s438
        %vm440 = vcmp.lt.s32.totalorder %v437, %v439
        %v441 = vsel %vm440, 0.0, -10000.0
        %v442 = vld [vmem:[%s391] sm:$0xff]
        %v443 = vpack.c.bf16 %v435, %v435
        %v444 = vld [vmem:[%s372] sm:$0xf]
        %v445 = vld [vmem:[%s372 + $0x4] sm:$0xf]
        %v446 = vld [vmem:[%s372 + $0x8] sm:$0xf]
        %v447 = vld [vmem:[%s372 + $0xc] sm:$0xf]
        %v448 = vperm.slane %v442, 0
        %v453 = vunpack.c.l.b16 %v444
        %v454 = vunpack.c.l.b16 %v445
        %v455 = vunpack.c.l.b16 %v446
        %v456 = vunpack.c.l.b16 %v447
        %v457 = vpack.c.b16 %v454, %v453
        %v458 = vpack.c.b16 %v456, %v455
        %vm461 = vcmask 261120
        %v463 = vsel %vm461, %v443, 0
        %465 = vmatpush.bf16.msra.mxu0 0
        %466 = vmatpush.bf16.msra.mxu0 0
        %467 = vmatpush.bf16.msra.mxu0 0
        %468 = vmatpush.bf16.msra.mxu0 0
        %469 = vmatpush.bf16.msra.mxu0 0
        %470 = vmatpush.bf16.msra.mxu0 0
        %471 = vmatpush.bf16.msra.mxu0 %v458
        %472 = vmatpush.bf16.msra.mxu0 %v457
        %473 = vmatmul.bf16.gmra.mxu0 %v463
        %v474 = vpop.f32.mrf.mxu0
        %v475 = vadd.f32 %v448, %v474
        %v476 = vpop.f32.mrf.mxu0
        %477 = vdwg.mxu0
        %v478 = vpack.c.bf16 %v475, %v475
        %480 = vrot.lane.b32.xlu0 %v478, 96
        %v481 = vpop.permute.xlu0 %480
        %vm482 = vcmask 64512
        %v484 = vsel %vm482, %v478, 0
        %v487 = vsel %vm482, %v481, 0
        %489 = vmatpush.bf16.xpose.msra.mxu0 0
        %490 = vmatpush.bf16.xpose.msra.mxu0 0
        %491 = vmatpush.bf16.xpose.msra.mxu0 0
        %492 = vmatpush.bf16.xpose.msra.mxu0 0
        %493 = vmatpush.bf16.xpose.msra.mxu0 0
        %494 = vmatpush.bf16.xpose.msra.mxu0 0
        %495 = vmatpush.bf16.xpose.msra.mxu0 0
        %496 = vmatpush.bf16.xpose.msra.mxu0 %v487
        %497 = vmatmul.bf16.gmra.mxu0 %v484
        %v498 = vpop.f32.mrf.mxu0
        %v499 = vadd.f32 0.0, %v498
        %v500 = vpop.f32.mrf.mxu0
        %501 = vdwg.mxu0
        %v502 = vmul.f32 %v499, 0.35355338
        %v503 = vadd.f32 %v502, %v441
        %v504 = vsel %vm482, %v503, -inf
        %505 = vmax.xlane.f32.xlu0 %v504
        %v506 = vpop.xlane.xlu0 %505
        %v507 = vsub.f32 %v503, %v506
        %v508 = vmul.f32 %v507, 1.442695
        %v509 = vpow.pop %v508
        %v510 = vsel %vm482, %v509, 0.0
        %511 = vadd.xlane.f32.xlu0 %v510
        %v512 = vpop.xlane.xlu0 %511
        %v513 = vrcp.pop %v512
        %v514 = vmul.f32 %v512, %v513
        %v515 = vsub.f32 1.0, %v514
        %v516 = vmul.f32 %v513, %v515
        %v517 = vadd.f32 %v513, %v516
        %vm518 = vweird.f32 %v512
        %vm519 = vweird.f32 %v513
        %vm520 = vmor %vm518, %vm519
        %v521 = vsel %vm520, %v513, %v517
        %v522 = vand.u32 2147483647, %v512
        %vm523 = vcmp.eq.f32.partialorder %v522, 8.507059e+37
        %v524 = vand.u32 %v512, 2147483648
        %v525 = vor.u32 1.1754944e-38, %v524
        %v526 = vsel %vm523, %v525, %v521
        %v527 = vmul.f32 %v509, %v526
        %v528 = vpack.c.bf16 %v527, %v527
        %529 = vrot.lane.b32.xlu0 %v478, 64
        %v530 = vpop.permute.xlu0 %529
        %v532 = vsel %vm482, %v528, 0
        %vm534 = vcmask 1043456
        %v536 = vsel %vm534, %v530, 0
        %538 = vmatpush.bf16.msra.mxu0 0
        %539 = vmatpush.bf16.msra.mxu0 0
        %540 = vmatpush.bf16.msra.mxu0 0
        %541 = vmatpush.bf16.msra.mxu0 0
        %542 = vmatpush.bf16.msra.mxu0 0
        %543 = vmatpush.bf16.msra.mxu0 0
        %544 = vmatpush.bf16.msra.mxu0 0
        %545 = vmatpush.bf16.msra.mxu0 %v536
        %546 = vmatmul.bf16.gmra.mxu0 %v532
        %v547 = vpop.f32.mrf.mxu0
        %v548 = vadd.f32 0.0, %v547
        %v549 = vpop.f32.mrf.mxu0
        %550 = vdwg.mxu0
        %551 = vrot.lane.b32.xlu0 %v478, 120
        %v552 = vpop.permute.xlu0 %551
        %553 = vrot.lane.b32.xlu0 %v478, 88
        %v554 = vpop.permute.xlu0 %553
        %v556 = vsel %vm482, %v552, 0
        %v559 = vsel %vm482, %v554, 0
        %561 = vmatpush.bf16.xpose.msra.mxu0 0
        %562 = vmatpush.bf16.xpose.msra.mxu0 0
        %563 = vmatpush.bf16.xpose.msra.mxu0 0
        %564 = vmatpush.bf16.xpose.msra.mxu0 0
        %565 = vmatpush.bf16.xpose.msra.mxu0 0
        %566 = vmatpush.bf16.xpose.msra.mxu0 0
        %567 = vmatpush.bf16.xpose.msra.mxu0 0
        %568 = vmatpush.bf16.xpose.msra.mxu0 %v559
        %569 = vmatmul.bf16.gmra.mxu0 %v556
        %v570 = vpop.f32.mrf.mxu0
        %v571 = vadd.f32 0.0, %v570
        %v572 = vpop.f32.mrf.mxu0
        %573 = vdwg.mxu0
        %v574 = vmul.f32 %v571, 0.35355338
        %v575 = vadd.f32 %v574, %v441
        %v576 = vsel %vm482, %v575, -inf
        %577 = vmax.xlane.f32.xlu0 %v576
        %v578 = vpop.xlane.xlu0 %577
        %v579 = vsub.f32 %v575, %v578
        %v580 = vmul.f32 %v579, 1.442695
        %v581 = vpow.pop %v580
        %v582 = vsel %vm482, %v581, 0.0
        %583 = vadd.xlane.f32.xlu0 %v582
        %v584 = vpop.xlane.xlu0 %583
        %v585 = vrcp.pop %v584
        %v586 = vmul.f32 %v584, %v585
        %v587 = vsub.f32 1.0, %v586
        %v588 = vmul.f32 %v585, %v587
        %v589 = vadd.f32 %v585, %v588
        %vm590 = vweird.f32 %v584
        %vm591 = vweird.f32 %v585
        %vm592 = vmor %vm590, %vm591
        %v593 = vsel %vm592, %v585, %v589
        %v594 = vand.u32 2147483647, %v584
        %vm595 = vcmp.eq.f32.partialorder %v594, 8.507059e+37
        %v596 = vand.u32 %v584, 2147483648
        %v597 = vor.u32 1.1754944e-38, %v596
        %v598 = vsel %vm595, %v597, %v593
        %v599 = vmul.f32 %v581, %v598
        %v600 = vpack.c.bf16 %v599, %v599
        %601 = vrot.lane.b32.xlu0 %v478, 56
        %v602 = vpop.permute.xlu0 %601
        %v604 = vsel %vm482, %v600, 0
        %v607 = vsel %vm534, %v602, 0
        %609 = vmatpush.bf16.msra.mxu0 0
        %610 = vmatpush.bf16.msra.mxu0 0
        %611 = vmatpush.bf16.msra.mxu0 0
        %612 = vmatpush.bf16.msra.mxu0 0
        %613 = vmatpush.bf16.msra.mxu0 0
        %614 = vmatpush.bf16.msra.mxu0 0
        %615 = vmatpush.bf16.msra.mxu0 0
        %616 = vmatpush.bf16.msra.mxu0 %v607
        %617 = vmatmul.bf16.gmra.mxu0 %v604
        %v618 = vpop.f32.mrf.mxu0
        %v619 = vadd.f32 0.0, %v618
        %v620 = vpop.f32.mrf.mxu0
        %621 = vdwg.mxu0
        %622 = vrot.lane.b32.xlu0 %v478, 112
        %v623 = vpop.permute.xlu0 %622
        %624 = vrot.lane.b32.xlu0 %v478, 80
        %v625 = vpop.permute.xlu0 %624
        %v627 = vsel %vm482, %v623, 0
        %v630 = vsel %vm482, %v625, 0
        %632 = vmatpush.bf16.xpose.msra.mxu0 0
        %633 = vmatpush.bf16.xpose.msra.mxu0 0
        %634 = vmatpush.bf16.xpose.msra.mxu0 0
        %635 = vmatpush.bf16.xpose.msra.mxu0 0
        %636 = vmatpush.bf16.xpose.msra.mxu0 0
        %637 = vmatpush.bf16.xpose.msra.mxu0 0
        %638 = vmatpush.bf16.xpose.msra.mxu0 0
        %639 = vmatpush.bf16.xpose.msra.mxu0 %v630
        %640 = vmatmul.bf16.gmra.mxu0 %v627
        %v641 = vpop.f32.mrf.mxu0
        %v642 = vadd.f32 0.0, %v641
        %v643 = vpop.f32.mrf.mxu0
        %644 = vdwg.mxu0
        %v645 = vmul.f32 %v642, 0.35355338
        %v646 = vadd.f32 %v645, %v441
        %v647 = vsel %vm482, %v646, -inf
        %648 = vmax.xlane.f32.xlu0 %v647
        %v649 = vpop.xlane.xlu0 %648
        %v650 = vsub.f32 %v646, %v649
        %v651 = vmul.f32 %v650, 1.442695
        %v652 = vpow.pop %v651
        %v653 = vsel %vm482, %v652, 0.0
        %654 = vadd.xlane.f32.xlu0 %v653
        %v655 = vpop.xlane.xlu0 %654
        %v656 = vrcp.pop %v655
        %v657 = vmul.f32 %v655, %v656
        %v658 = vsub.f32 1.0, %v657
        %v659 = vmul.f32 %v656, %v658
        %v660 = vadd.f32 %v656, %v659
        %vm661 = vweird.f32 %v655
        %vm662 = vweird.f32 %v656
        %vm663 = vmor %vm661, %vm662
        %v664 = vsel %vm663, %v656, %v660
        %v665 = vand.u32 2147483647, %v655
        %vm666 = vcmp.eq.f32.partialorder %v665, 8.507059e+37
        %v667 = vand.u32 %v655, 2147483648
        %v668 = vor.u32 1.1754944e-38, %v667
        %v669 = vsel %vm666, %v668, %v664
        %v670 = vmul.f32 %v652, %v669
        %v671 = vpack.c.bf16 %v670, %v670
        %672 = vrot.lane.b32.xlu0 %v478, 48
        %v673 = vpop.permute.xlu0 %672
        %v675 = vsel %vm482, %v671, 0
        %v678 = vsel %vm534, %v673, 0
        %680 = vmatpush.bf16.msra.mxu0 0
        %681 = vmatpush.bf16.msra.mxu0 0
        %682 = vmatpush.bf16.msra.mxu0 0
        %683 = vmatpush.bf16.msra.mxu0 0
        %684 = vmatpush.bf16.msra.mxu0 0
        %685 = vmatpush.bf16.msra.mxu0 0
        %686 = vmatpush.bf16.msra.mxu0 0
        %687 = vmatpush.bf16.msra.mxu0 %v678
        %688 = vmatmul.bf16.gmra.mxu0 %v675
        %v689 = vpop.f32.mrf.mxu0
        %v690 = vadd.f32 0.0, %v689
        %v691 = vpop.f32.mrf.mxu0
        %692 = vdwg.mxu0
        %693 = vrot.lane.b32.xlu0 %v478, 104
        %v694 = vpop.permute.xlu0 %693
        %695 = vrot.lane.b32.xlu0 %v478, 72
        %v696 = vpop.permute.xlu0 %695
        %v698 = vsel %vm482, %v694, 0
        %v701 = vsel %vm482, %v696, 0
        %703 = vmatpush.bf16.xpose.msra.mxu0 0
        %704 = vmatpush.bf16.xpose.msra.mxu0 0
        %705 = vmatpush.bf16.xpose.msra.mxu0 0
        %706 = vmatpush.bf16.xpose.msra.mxu0 0
        %707 = vmatpush.bf16.xpose.msra.mxu0 0
        %708 = vmatpush.bf16.xpose.msra.mxu0 0
        %709 = vmatpush.bf16.xpose.msra.mxu0 0
        %710 = vmatpush.bf16.xpose.msra.mxu0 %v701
        %711 = vmatmul.bf16.gmra.mxu0 %v698
        %v712 = vpop.f32.mrf.mxu0
        %v713 = vadd.f32 0.0, %v712
        %v714 = vpop.f32.mrf.mxu0
        %715 = vdwg.mxu0
        %v716 = vmul.f32 %v713, 0.35355338
        %v717 = vadd.f32 %v716, %v441
        %v718 = vsel %vm482, %v717, -inf
        %719 = vmax.xlane.f32.xlu0 %v718
        %v720 = vpop.xlane.xlu0 %719
        %v721 = vsub.f32 %v717, %v720
        %v722 = vmul.f32 %v721, 1.442695
        %v723 = vpow.pop %v722
        %v724 = vsel %vm482, %v723, 0.0
        %725 = vadd.xlane.f32.xlu0 %v724
        %v726 = vpop.xlane.xlu0 %725
        %v727 = vrcp.pop %v726
        %v728 = vmul.f32 %v726, %v727
        %v729 = vsub.f32 1.0, %v728
        %v730 = vmul.f32 %v727, %v729
        %v731 = vadd.f32 %v727, %v730
        %vm732 = vweird.f32 %v726
        %vm733 = vweird.f32 %v727
        %vm734 = vmor %vm732, %vm733
        %v735 = vsel %vm734, %v727, %v731
        %v736 = vand.u32 2147483647, %v726
        %vm737 = vcmp.eq.f32.partialorder %v736, 8.507059e+37
        %v738 = vand.u32 %v726, 2147483648
        %v739 = vor.u32 1.1754944e-38, %v738
        %v740 = vsel %vm737, %v739, %v735
        %v741 = vmul.f32 %v723, %v740
        %v742 = vpack.c.bf16 %v741, %v741
        %743 = vrot.lane.b32.xlu0 %v478, 40
        %v744 = vpop.permute.xlu0 %743
        %v746 = vsel %vm482, %v742, 0
        %v749 = vsel %vm534, %v744, 0
        %751 = vmatpush.bf16.msra.mxu0 0
        %752 = vmatpush.bf16.msra.mxu0 0
        %753 = vmatpush.bf16.msra.mxu0 0
        %754 = vmatpush.bf16.msra.mxu0 0
        %755 = vmatpush.bf16.msra.mxu0 0
        %756 = vmatpush.bf16.msra.mxu0 0
        %757 = vmatpush.bf16.msra.mxu0 0
        %758 = vmatpush.bf16.msra.mxu0 %v749
        %759 = vmatmul.bf16.gmra.mxu0 %v746
        %v760 = vpop.f32.mrf.mxu0
        %v761 = vadd.f32 0.0, %v760
        %v762 = vpop.f32.mrf.mxu0
        %763 = vdwg.mxu0
        %765 = vrot.lane.b32.xlu0 %v619, 8
        %v766 = vpop.permute.xlu0 %765
        %769 = vrot.lane.b32.xlu0 %v690, 16
        %v770 = vpop.permute.xlu0 %769
        %773 = vrot.lane.b32.xlu0 %v761, 24
        %v774 = vpop.permute.xlu0 %773
        %v776 = vsel %vm482, %v548, %v766
        %vm777 = vcmask 130048
        %v778 = vsel %vm777, %v776, %v770
        %vm779 = vcmask 195584
        %v780 = vsel %vm779, %v778, %v774
        %v781 = vpack.c.bf16 %v780, %v780
        %v782 = vld [vmem:[%s377] sm:$0xf]
        %v783 = vld [vmem:[%s377 + $0x4] sm:$0xf]
        %v784 = vld [vmem:[%s377 + $0x8] sm:$0xf]
        %v785 = vld [vmem:[%s377 + $0xc] sm:$0xf]
        %v790 = vunpack.c.l.b16 %v782
        %v791 = vunpack.c.l.b16 %v783
        %v792 = vunpack.c.l.b16 %v784
        %v793 = vunpack.c.l.b16 %v785
        %v794 = vpack.c.b16 %v791, %v790
        %v795 = vpack.c.b16 %v793, %v792
        %v799 = vsel %vm461, %v781, 0
        %801 = vmatpush.bf16.msra.mxu0 0
        %802 = vmatpush.bf16.msra.mxu0 0
        %803 = vmatpush.bf16.msra.mxu0 0
        %804 = vmatpush.bf16.msra.mxu0 0
        %805 = vmatpush.bf16.msra.mxu0 0
        %806 = vmatpush.bf16.msra.mxu0 0
        %807 = vmatpush.bf16.msra.mxu0 %v795
        %808 = vmatpush.bf16.msra.mxu0 %v794
        %809 = vmatmul.bf16.gmra.mxu0 %v799
        %v810 = vpop.f32.mrf.mxu0
        %v811 = vadd.f32 0.0, %v810
        %v812 = vpop.f32.mrf.mxu0
        %813 = vdwg.mxu0
        %v814 = vadd.f32 %v435, %v811
        %v815 = vperm.slane %v442, 1
        %v816 = vadd.f32 %v814, %v815
        %v817 = vsel %vm461, %v816, 0.0
        %818 = vadd.xlane.f32.xlu0 %v817
        %v819 = vpop.xlane.xlu0 %818
        %v820 = vrcp.pop 32.0
        %v821 = vmul.f32 32.0, %v820
        %v822 = vsub.f32 1.0, %v821
        %v823 = vmul.f32 %v820, %v822
        %v824 = vadd.f32 %v820, %v823
        %vm825 = vweird.f32 %v820
        %v826 = vsel %vm825, %v820, %v824
        %v827 = vmul.f32 %v819, %v826
        %v828 = vsub.f32 %v816, %v827
        %v829 = vmul.f32 %v828, %v828
        %v830 = vsel %vm461, %v829, 0.0
        %831 = vadd.xlane.f32.xlu0 %v830
        %v832 = vpop.xlane.xlu0 %831
        %v833 = vmul.f32 %v832, %v826
        %v834 = vadd.f32 %v833, 1e-12
        %v835 = vrsqrt.pop %v834
        %v836 = vmul.f32 %v835, %v834
        %v837 = vmul.f32 %v836, %v835
        %v838 = vmul.f32 0.5, %v837
        %v839 = vsub.f32 1.5, %v838
        %v840 = vmul.f32 %v835, %v839
        %vm841 = vweird.f32 %v834
        %vm842 = vweird.f32 %v835
        %vm843 = vmor %vm841, %vm842
        %v844 = vsel %vm843, %v835, %v840
        %v845 = vmul.f32 %v828, %v844
        %v846 = vperm.slane %v442, 2
        %v847 = vmul.f32 %v845, %v846
        %v848 = vperm.slane %v442, 3
        %v849 = vadd.f32 %v847, %v848
        %v850 = vpack.c.bf16 %v849, %v849
        %v851 = vld [vmem:[%s382] sm:$0xf]
        %v852 = vld [vmem:[%s382 + $0x4] sm:$0xf]
        %v853 = vld [vmem:[%s382 + $0x8] sm:$0xf]
        %v854 = vld [vmem:[%s382 + $0xc] sm:$0xf]
        %v855 = vperm.slane %v442, 4
        %v860 = vunpack.c.l.b16 %v851
        %v861 = vunpack.c.l.b16 %v852
        %v862 = vunpack.c.l.b16 %v853
        %v863 = vunpack.c.l.b16 %v854
        %v864 = vpack.c.b16 %v861, %v860
        %v865 = vpack.c.b16 %v863, %v862
        %v869 = vsel %vm461, %v850, 0
        %871 = vmatpush.bf16.msra.mxu0 0
        %872 = vmatpush.bf16.msra.mxu0 0
        %873 = vmatpush.bf16.msra.mxu0 0
        %874 = vmatpush.bf16.msra.mxu0 0
        %875 = vmatpush.bf16.msra.mxu0 0
        %876 = vmatpush.bf16.msra.mxu0 0
        %877 = vmatpush.bf16.msra.mxu0 %v865
        %878 = vmatpush.bf16.msra.mxu0 %v864
        %879 = vmatmul.bf16.gmra.mxu0 %v869
        %v880 = vpop.f32.mrf.mxu0
        %v881 = vadd.f32 %v855, %v880
        %v882 = vpop.f32.mrf.mxu0
        %883 = vdwg.mxu0
        %v884 = vmul.f32 %v881, 0.5
        %v885 = vmul.f32 %v881, 0.044715
        %v886 = vmul.f32 %v885, %v881
        %v887 = vmul.f32 %v886, %v881
        %v888 = vadd.f32 %v881, %v887
        %v889 = vmul.f32 %v888, 0.7978846
        %v890 = vtanh.pop %v889
        %v891 = vadd.f32 %v890, 1.0
        %v892 = vmul.f32 %v884, %v891
        %v893 = vpack.c.bf16 %v892, %v892
        %v894 = vld [vmem:[%s387] sm:$0xf]
        %v895 = vld [vmem:[%s387 + $0x4] sm:$0xf]
        %v896 = vld [vmem:[%s387 + $0x8] sm:$0xf]
        %v897 = vld [vmem:[%s387 + $0xc] sm:$0xf]
        %v898 = vld [vmem:[%s387 + $0x10] sm:$0xf]
        %v899 = vld [vmem:[%s387 + $0x14] sm:$0xf]
        %v900 = vld [vmem:[%s387 + $0x18] sm:$0xf]
        %v901 = vld [vmem:[%s387 + $0x1c] sm:$0xf]
        %v902 = vperm.slane %v442, 5
        %v911 = vunpack.c.l.b16 %v894
        %v912 = vunpack.c.l.b16 %v895
        %v913 = vunpack.c.l.b16 %v896
        %v914 = vunpack.c.l.b16 %v897
        %v915 = vunpack.c.l.b16 %v898
        %v916 = vunpack.c.l.b16 %v899
        %v917 = vunpack.c.l.b16 %v900
        %v918 = vunpack.c.l.b16 %v901
        %v919 = vpack.c.b16 %v912, %v911
        %v920 = vpack.c.b16 %v914, %v913
        %v921 = vpack.c.b16 %v916, %v915
        %v922 = vpack.c.b16 %v918, %v917
        %vm927 = vcmask 523264
        %v929 = vsel %vm927, %v893, 0
        %931 = vmatpush.bf16.msra.mxu0 0
        %932 = vmatpush.bf16.msra.mxu0 0
        %933 = vmatpush.bf16.msra.mxu0 0
        %934 = vmatpush.bf16.msra.mxu0 0
        %935 = vmatpush.bf16.msra.mxu0 %v922
        %936 = vmatpush.bf16.msra.mxu0 %v921
        %937 = vmatpush.bf16.msra.mxu0 %v920
        %938 = vmatpush.bf16.msra.mxu0 %v919
        %939 = vmatmul.bf16.gmra.mxu0 %v929
        %v940 = vpop.f32.mrf.mxu0
        %v941 = vadd.f32 %v902, %v940
        %v942 = vpop.f32.mrf.mxu0
        %943 = vdwg.mxu0
        %v944 = vadd.f32 %v849, %v941
        %v945 = vsel %vm461, %v944, 0.0
        %946 = vadd.xlane.f32.xlu0 %v945
        %v947 = vpop.xlane.xlu0 %946
        %v948 = vmul.f32 %v947, %v826
        %v949 = vsub.f32 %v944, %v948
        %v950 = vmul.f32 %v949, %v949
        %v951 = vsel %vm461, %v950, 0.0
        %952 = vadd.xlane.f32.xlu0 %v951
        %v953 = vpop.xlane.xlu0 %952
        %v954 = vmul.f32 %v953, %v826
        %v955 = vadd.f32 %v954, 1e-12
        %v956 = vrsqrt.pop %v955
        %v957 = vmul.f32 %v956, %v955
        %v958 = vmul.f32 %v957, %v956
        %v959 = vmul.f32 0.5, %v958
        %v960 = vsub.f32 1.5, %v959
        %v961 = vmul.f32 %v956, %v960
        %vm962 = vweird.f32 %v955
        %vm963 = vweird.f32 %v956
        %vm964 = vmor %vm962, %vm963
        %v965 = vsel %vm964, %v956, %v961
        %v966 = vmul.f32 %v949, %v965
        %v967 = vperm.slane %v442, 6
        %v968 = vmul.f32 %v966, %v967
        %v969 = vperm.slane %v442, 7
        %v970 = vadd.f32 %v968, %v969
        %971 = vst.msk [vmem:[%s363] sm:$0xff] %vm461, %v970
        %s972 = sand.u32 %s227, 1
        %s973 = scalar_lea.sflag [#allocation5], %s972
        %s974 = sand.u32 %s227, 1
        %s975 = smul.addr %s974, 8
        %s976 = scalar_lea.vmem [#allocation4], %s975
        // Predicated region
        $region53: #{bert_forward.1} parent=47 // pred_check
          %p977 = pneg %p237
        $region54: #{bert_forward.1} parent=47 // pred_check_branch
          %979 = sbr.rel (%p977) target = $region56
        $region55: #{bert_forward.1} parent=47 // pred_region
          %981 = vsyncadd %s973, 0
          %s982 = smul.addr %s34, 8
          %s983 = scalar_lea.hbm %s8, %s982
          %s985 = sshll.u32 %s976, 4
          %s986 = int_to_ptr.vmem [resolvable:$true] %s985
          %s987 = sshll.u32 %s983, 4
          %s988 = int_to_ptr.hbm [resolvable:$true] %s987
          %990 = dma.vmem_to_hbm [thread:$0]  %s986, 128, %s988, %s973
        $region56: #{bert_forward.1} parent=47 // pred_fallthru
          _
      $region48: #{bert_forward.1} parent=5 // pred_fallthru
        _
      %p991 = scmp.le.s32.totalorder 2, %s25
      // Predicated region
      $region57: #{bert_forward.1} parent=5 // pred_check
        %p992 = pneg %p991
      $region58: #{bert_forward.1} parent=5 // pred_check_branch
        %994 = sbr.rel (%p992) target = $region60
      $region59: #{bert_forward.1} parent=5 // pred_region
        %s995 = ssub.s32 %s25, 2
        // Predicated region
        $region61: #{bert_forward.1} parent=59 // pred_check
          %p996 = pneg %p243
        $region62: #{bert_forward.1} parent=59 // pred_check_branch
          %998 = sbr.rel (%p996) target = $region64
        $region63: #{bert_forward.1} parent=59 // pred_region
          %s999 = sand.u32 %s228, 1
          %s1000 = scalar_lea.sflag [#allocation5], %s999
          %s1001 = sand.u32 %s228, 1
          %s1002 = smul.addr %s1001, 8
          %s1003 = scalar_lea.vmem [#allocation4], %s1002
          %1005 = dma.done %s1000, 128
        $region64: #{bert_forward.1} parent=59 // pred_fallthru
          _
      $region60: #{bert_forward.1} parent=5 // pred_fallthru
        _
    $region6: #{bert_forward.1} parent=1 // loop_footer
      %s29 = sadd.s32 1, %s25
    $region7: #{bert_forward.1} parent=1 // loop_footer_branch
      %24 = sbr.rel target = $region3
    $region8: #{bert_forward.1} parent=1 // loop_exit
      _
    %1006 = vsyncpa [#allocation5], 1
    %s1007 = scalar_lea.sflag [#allocation5], 1
    %1008 = vsyncpa %s1007, 1

</llo_original>
